<compile_context>
chip_gen: v7x
topology: tpu7x:2x2x1
jax: 0.10.0
libtpu: 0.0.40
codegen_flags: <defaults>
</compile_context>

<pallas_src>
import jax
import jax.numpy as jnp
import numpy as np
from jax.experimental import pallas as pl
from jax.experimental.pallas import tpu as pltpu


def _critic_kernel(x_ref, w1t_ref, b1_ref, w2_ref, b2_ref, o_ref):
    """One batch tile, computed lane-major.

    x_ref  : (TB, S)    activation tile (f32 or bf16)
    w1t_ref: (H, S)     first-layer weight, transposed (VMEM resident)
    b1_ref : (H, 1)     first-layer bias as a column   (VMEM resident)
    w2_ref : (1, H)     second-layer weight as a row   (VMEM resident)
    b2_ref : (1, 1)     second-layer bias, SMEM scalar
    o_ref  : (1, 1, TB) lane-dense output row for this tile
    """
    # hT = W1^T @ x^T  -> (H, TB), f32 accumulation on the MXU.  The rhs-transposed
    # contraction only moves the small (TB, S) x tile, not a (TB, H) hidden tile.
    h_t = jax.lax.dot_general(
        w1t_ref[...], x_ref[...],
        dimension_numbers=(((1,), (1,)), ((), ())),
        preferred_element_type=jnp.float32)                      # (H, TB)
    h_t = jnp.maximum(h_t + b1_ref[...], 0.0)                    # bias + relu (VPU, f32)

    # yT = w2^T @ hT : (1, H) @ (H, TB) -> (1, TB), lane-major result.
    y_row = jnp.dot(w2_ref[...], h_t, preferred_element_type=jnp.float32)
    y_row = y_row + b2_ref[0, 0]                                 # SMEM scalar bias
    o_ref[...] = y_row.reshape(o_ref.shape).astype(o_ref.dtype)


def _cdiv(a, b):
    return -(-a // b)


def _round_up(a, m):
    return _cdiv(a, m) * m


def _vmem_capacity_bytes():
    try:
        return int(pltpu.get_tpu_info().vmem_capacity_bytes)
    except Exception:
        return 64 * 1024 * 1024   # conservative fallback = v7x per-TC VMEM


def _choose_tiling(B, S, H, x_itemsize, w_itemsize, max_block_b):
    """Pick a 128-multiple batch tile from a VMEM byte budget, balancing tiles
    so padding waste stays < 128 rows, and size vmem_limit_bytes to match."""
    vmem_cap = _vmem_capacity_bytes()
    budget = int(vmem_cap * 0.45)                     # usable scoped VMEM w/ headroom
    # Per batch row: double-buffered x tile + (H, tb) f32 hT + double-buffered out row.
    per_row = 2 * S * x_itemsize + H * 4 + 2 * 4
    # Resident (but double-buffered) W1^T, b1, w2 row + slack for temporaries.
    fixed = 2 * (H * S * w_itemsize + 2 * H * 4) + (256 << 10)

    cap = max(128, (budget - fixed) // per_row)
    cap = min(int(cap), int(max_block_b))
    cap = max(128, (cap // 128) * 128)                # lane-dense tiles only

    n_tiles = max(1, _cdiv(B, cap))                   # balance tiles first ...
    tb = _round_up(_cdiv(B, n_tiles), 128)            # ... then round tile to 128

    est = fixed + per_row * tb
    vmem_limit = int(min(vmem_cap * 0.75, max(32 << 20, 2 * est)))
    vmem_limit = max(vmem_limit, est + (4 << 20))
    return tb, n_tiles, vmem_limit


def critic_forward(x, w1, b1, w2, b2, *, max_block_b=8192, use_bf16=False):
    """x: (B, state_dim) f32.  Weights stored transposed vs torch nn.Linear:
    w1: (state_dim, 128), b1: (128,), w2: (128, 1), b2: (1,).
    Returns (B, 1) f32, matching torch Critic.forward."""
    B, S = x.shape
    H = w1.shape[1]
    assert w1.shape == (S, H) and w2.shape == (H, 1)
    assert b1.shape == (H,) and b2.shape == (1,)

    x_dtype = jnp.bfloat16 if use_bf16 else x.dtype
    x_itemsize = jnp.dtype(x_dtype).itemsize
    w_itemsize = x_itemsize

    tb, n_tiles, vmem_limit = _choose_tiling(B, S, H, x_itemsize, w_itemsize,
                                             max_block_b)
    padded_b = tb * n_tiles
    if padded_b != B:
        # Do NOT pad S: keeps the dominant x DMA stream fully contiguous/minimal.
        x = jnp.pad(x, ((0, padded_b - B), (0, 0)))

    w1t = jnp.asarray(w1).T                                   # (H, S) lane-major weight
    if use_bf16:
        # Halves the dominant HBM stream on v5e/v6e; accumulation, bias add and
        # relu stay f32 (also avoids v5e's missing bf16 VPU path issues).
        x = x.astype(jnp.bfloat16)
        w1t = w1t.astype(jnp.bfloat16)

    b1_col = b1.reshape(H, 1).astype(jnp.float32)
    w2_row = w2.reshape(1, H).astype(jnp.float32)
    b2_scalar = b2.reshape(1, 1).astype(jnp.float32)

    # Advisory cost estimate so XLA overlaps this mem-bound kernel with neighbors.
    flops = 2 * padded_b * H * (S + 1)
    bytes_accessed = (padded_b * S * x_itemsize + H * S * w_itemsize
                      + 2 * H * 4 + 4 + padded_b * 4)
    cost = pl.CostEstimate(flops=int(flops), transcendentals=0,
                           bytes_accessed=int(bytes_accessed))

    out = pl.pallas_call(
        _critic_kernel,
        out_shape=jax.ShapeDtypeStruct((n_tiles, 1, tb), jnp.float32),
        grid=(n_tiles,),
        in_specs=[
            pl.BlockSpec((tb, S), lambda i: (i, 0)),              # x: batch-tiled
            pl.BlockSpec((H, S), lambda i: (0, 0)),               # W1^T: resident
            pl.BlockSpec((H, 1), lambda i: (0, 0)),               # b1 column: resident
            pl.BlockSpec((1, H), lambda i: (0, 0)),               # w2 row: resident
            pl.BlockSpec(memory_space=pltpu.MemorySpace.SMEM),    # b2 scalar
        ],
        out_specs=pl.BlockSpec((1, 1, tb), lambda i: (i, 0, 0)),  # lane-dense slab
        compiler_params=pltpu.CompilerParams(
            # "parallel" lets the runtime shard batch tiles across TensorCores
            # (v7x 2-TC); neutral on v5e/v6e single-TC chips.
            dimension_semantics=("parallel",),
            vmem_limit_bytes=vmem_limit),
        cost_estimate=cost,
    )(x, w1t, b1_col, w2_row, b2_scalar)

    return out.reshape(padded_b, 1)[:B]


def init_critic_params(key, state_dim, hidden=128, out=1):
    """Deterministic init mimicking torch.nn.Linear default
    (uniform(-1/sqrt(fan_in), 1/sqrt(fan_in)))."""
    k1, k2, k3, k4 = jax.random.split(key, 4)
    lim1 = 1.0 / np.sqrt(state_dim)
    lim2 = 1.0 / np.sqrt(hidden)
    w1 = jax.random.uniform(k1, (state_dim, hidden), jnp.float32, -lim1, lim1)
    b1 = jax.random.uniform(k2, (hidden,), jnp.float32, -lim1, lim1)
    w2 = jax.random.uniform(k3, (hidden, out), jnp.float32, -lim2, lim2)
    b2 = jax.random.uniform(k4, (out,), jnp.float32, -lim2, lim2)
    return w1, b1, w2, b2


if __name__ == "__main__":
    key = jax.random.PRNGKey(0)
    k_x, k_p = jax.random.split(key)

    batch, state_dim = 10, 32        # non-multiple-of-128 batch exercises padding
    x = jax.random.normal(k_x, (batch, state_dim), jnp.float32)
    w1, b1, w2, b2 = init_critic_params(k_p, state_dim)
    ref = jnp.maximum(x @ w1 + b1, 0.0) @ w2 + b2

    # f32 path, single 128-row tile (batch padded 10 -> 128).
    y = jax.block_until_ready(critic_forward(x, w1, b1, w2, b2))
    np.testing.assert_allclose(np.asarray(y), np.asarray(ref), rtol=1e-5, atol=1e-5)
    assert y.shape == (batch, 1)

    # Multi-tile path: small cap forces grid > 1 with balanced 128-multiple tiles.
    batch2 = 300
    x2 = jax.random.normal(k_x, (batch2, state_dim), jnp.float32)
    ref2 = jnp.maximum(x2 @ w1 + b1, 0.0) @ w2 + b2
    y2 = jax.block_until_ready(critic_forward(x2, w1, b1, w2, b2, max_block_b=128))
    np.testing.assert_allclose(np.asarray(y2), np.asarray(ref2), rtol=1e-5, atol=1e-5)
    assert y2.shape == (batch2, 1)

    # bf16 input/weight path (f32 accumulation) -> loosened tolerance.
    y3 = jax.block_until_ready(critic_forward(x, w1, b1, w2, b2, use_bf16=True))
    np.testing.assert_allclose(np.asarray(y3), np.asarray(ref), rtol=5e-2, atol=3e-2)

    print("KERNEL_OK")
</pallas_src>

<mosaic_0001>
module attributes {stable_mosaic.version = 11 : i64} {
  func.func @_critic_kernel(%arg0: i32, %arg1: memref<128x32xf32, #tpu.memory_space<vmem>>, %arg2: memref<128x32xf32, #tpu.memory_space<vmem>>, %arg3: memref<128x1xf32, #tpu.memory_space<vmem>>, %arg4: memref<1x128xf32, #tpu.memory_space<vmem>>, %arg5: memref<1x1xf32, #tpu.memory_space<smem>>, %arg6: memref<1x1x128xf32, #tpu.memory_space<vmem>>) attributes {dimension_semantics = [#tpu.dimension_semantics<parallel>], iteration_bounds = array<i64: 1>, scalar_prefetch = 0 : i64, scratch_operands = 0 : i64, tpu.core_type = #tpu.core_type<tc>, window_params = [{transform_indices = @transform_0, window_bounds = array<i64: 128, 32>}, {pipeline_mode = #tpu.pipeline_mode<synchronous>, transform_indices = @transform_1, window_bounds = array<i64: 128, 32>}, {pipeline_mode = #tpu.pipeline_mode<synchronous>, transform_indices = @transform_2, window_bounds = array<i64: 128, 1>}, {pipeline_mode = #tpu.pipeline_mode<synchronous>, transform_indices = @transform_3, window_bounds = array<i64: 1, 128>}, {transform_indices = @transform_4, window_bounds = array<i64: 1, 1>}, {transform_indices = @transform_5, window_bounds = array<i64: 1, 1, 128>}]} {
    %c0 = arith.constant 0 : index
    %c0_0 = arith.constant 0 : index
    %0 = vector.load %arg2[%c0, %c0_0] : memref<128x32xf32, #tpu.memory_space<vmem>>, vector<128x32xf32>
    %c0_1 = arith.constant 0 : index
    %c0_2 = arith.constant 0 : index
    %1 = vector.load %arg1[%c0_1, %c0_2] : memref<128x32xf32, #tpu.memory_space<vmem>>, vector<128x32xf32>
    %cst = arith.constant dense<0.000000e+00> : vector<128x128xf32>
    %2 = tpu.matmul %0, %1, %cst {dimension_numbers = #tpu.dot_dimension_numbers<[1], [1], [0], [0], [0, 0, 1, 0], [], []>} : vector<128x32xf32>, vector<128x32xf32>, vector<128x128xf32> -> vector<128x128xf32>
    %c0_3 = arith.constant 0 : index
    %c0_4 = arith.constant 0 : index
    %3 = vector.load %arg3[%c0_3, %c0_4] : memref<128x1xf32, #tpu.memory_space<vmem>>, vector<128x1xf32>
    %4 = vector.broadcast %3 : vector<128x1xf32> to vector<128x128xf32>
    %5 = arith.addf %2, %4 : vector<128x128xf32>
    %cst_5 = arith.constant 0.000000e+00 : f32
    %6 = vector.broadcast %cst_5 : f32 to vector<128x128xf32>
    %7 = arith.maximumf %5, %6 : vector<128x128xf32>
    %c0_6 = arith.constant 0 : index
    %c0_7 = arith.constant 0 : index
    %8 = vector.load %arg4[%c0_6, %c0_7] : memref<1x128xf32, #tpu.memory_space<vmem>>, vector<1x128xf32>
    %cst_8 = arith.constant dense<0.000000e+00> : vector<1x128xf32>
    %9 = tpu.matmul %8, %7, %cst_8 {dimension_numbers = #tpu.dot_dimension_numbers<[1], [0], [0], [1], [0, 0, 1, 1], [], []>} : vector<1x128xf32>, vector<128x128xf32>, vector<1x128xf32> -> vector<1x128xf32>
    %c0_9 = arith.constant 0 : index
    %c0_10 = arith.constant 0 : index
    %10 = memref.load %arg5[%c0_9, %c0_10] : memref<1x1xf32, #tpu.memory_space<smem>>
    %11 = vector.broadcast %10 : f32 to vector<1x128xf32>
    %12 = arith.addf %9, %11 : vector<1x128xf32>
    %13 = vector.shape_cast %12 : vector<1x128xf32> to vector<1x1x128xf32>
    %c0_11 = arith.constant 0 : index
    %c0_12 = arith.constant 0 : index
    %c0_13 = arith.constant 0 : index
    %14 = vector.load %arg6[%c0_11, %c0_12, %c0_13] : memref<1x1x128xf32, #tpu.memory_space<vmem>>, vector<1x1x128xf32>
    tpu.vector_store %arg6[%c0_11, %c0_12, %c0_13], %13 {strides = array<i32>} : memref<1x1x128xf32, #tpu.memory_space<vmem>>, vector<1x1x128xf32>,
    return
  }
  func.func @transform_0(%arg0: i32) -> (i32, i32) {
    %c0_i32 = arith.constant 0 : i32
    %c0_i32_0 = arith.constant 0 : i32
    return %arg0, %c0_i32 : i32, i32
  }
  func.func @transform_1(%arg0: i32) -> (i32, i32) {
    %c0_i32 = arith.constant 0 : i32
    %c0_i32_0 = arith.constant 0 : i32
    %c0_i32_1 = arith.constant 0 : i32
    return %c0_i32, %c0_i32_0 : i32, i32
  }
  func.func @transform_2(%arg0: i32) -> (i32, i32) {
    %c0_i32 = arith.constant 0 : i32
    %c0_i32_0 = arith.constant 0 : i32
    %c0_i32_1 = arith.constant 0 : i32
    return %c0_i32, %c0_i32_0 : i32, i32
  }
  func.func @transform_3(%arg0: i32) -> (i32, i32) {
    %c0_i32 = arith.constant 0 : i32
    %c0_i32_0 = arith.constant 0 : i32
    %c0_i32_1 = arith.constant 0 : i32
    return %c0_i32, %c0_i32_0 : i32, i32
  }
  func.func @transform_4(%arg0: i32) -> (i32, i32) {
    %c0_i32 = arith.constant 0 : i32
    %c0_i32_0 = arith.constant 0 : i32
    %c0_i32_1 = arith.constant 0 : i32
    return %c0_i32, %c0_i32_0 : i32, i32
  }
  func.func @transform_5(%arg0: i32) -> (i32, i32, i32) {
    %c0_i32 = arith.constant 0 : i32
    %c0_i32_0 = arith.constant 0 : i32
    %c0_i32_1 = arith.constant 0 : i32
    return %arg0, %c0_i32, %c0_i32_0 : i32, i32, i32
  }
}

</mosaic_0001>

<llo_original>
// kernel: tpu_custom_call.1
$region0: #{tpu_custom_call.1}
  #allocation0 [shape = 'u32[]', space=smem, size = 0x4, offset = 0x4, fixed_abs, tag = 'smem constant byte address 0x4 - core index']
  #allocation1 [shape = 'u32[144,128]{1,0:T(1,128)}', space=vmem, size = 0x12000, scoped, tag = 'internal scratch']
  #allocation2 [shape = 'f32[1,1]{1,0:T(1,128)S(6)}', space=smem, size = 0x200, scoped, tag = 'scoped memory for tpu_custom_call.1']
  %s0 = inlined_call_operand.vmem [shape: f32[128,32], index: 0, kind: input, shape index: {}]
  %s1 = inlined_call_operand.vmem [shape: f32[128,32], index: 1, kind: input, shape index: {}]
  %s2 = inlined_call_operand.vmem [shape: f32[128,1], index: 2, kind: input, shape index: {}]
  %s3 = inlined_call_operand.vmem [shape: f32[1,128], index: 3, kind: input, shape index: {}]
  %s4 = inlined_call_operand.<no memory space> [shape: f32[1,1], index: 4, kind: input, shape index: {}]
  %s5 = inlined_call_operand.hbm [shape: f32[1,1,128], index: 5, kind: output, shape index: {}]
  %s6 = sld [smem:[#allocation0]]
  $region30: #{tpu_custom_call.1} parent=0
    _
  %s8 = ssub.s32 1, %s6
  %s9 = scalar_select 0, %s8, %s6
  %10 = sst [smem:[#allocation2]] %s4
  $region1: #{tpu_custom_call.1} parent=0
    #allocation3 [shape = 'u8[512]{0}', space=vmem, size = 0x400, scoped, tag = 'output window, operand 0, single buffered']
    #allocation4 [shape = 's32[1]{0}', space=sflag, size = 0x4, scoped, tag = 'scoped memory for tpu_custom_call.1']
    %11 = vsyncpa [#allocation4], 0
    // Predicated region
    $region2: #{tpu_custom_call.1} parent=1 // pred_check
      _
    $region3: #{tpu_custom_call.1} parent=1 // pred_check_branch
      %13 = sbr.rel (0) target = $region5
    $region4: #{tpu_custom_call.1} parent=1 // pred_region
      _
    $region5: #{tpu_custom_call.1} parent=1 // pred_fallthru
      _
    // Predicated region
    $region6: #{tpu_custom_call.1} parent=1 // pred_check
      _
    $region7: #{tpu_custom_call.1} parent=1 // pred_check_branch
      %15 = sbr.rel (0) target = $region9
    $region8: #{tpu_custom_call.1} parent=1 // pred_region
      _
    $region9: #{tpu_custom_call.1} parent=1 // pred_fallthru
      _
    // Predicated region
    $region10: #{tpu_custom_call.1} parent=1 // pred_check
      _
    $region11: #{tpu_custom_call.1} parent=1 // pred_check_branch
      %17 = sbr.rel (0) target = $region13
    $region12: #{tpu_custom_call.1} parent=1 // pred_region
      _
    $region13: #{tpu_custom_call.1} parent=1 // pred_fallthru
      _
    // Predicated region
    $region14: #{tpu_custom_call.1} parent=1 // pred_check
      _
    $region15: #{tpu_custom_call.1} parent=1 // pred_check_branch
      %19 = sbr.rel (0) target = $region17
    $region16: #{tpu_custom_call.1} parent=1 // pred_region
      _
    $region17: #{tpu_custom_call.1} parent=1 // pred_fallthru
      _
    // Predicated region
    $region18: #{tpu_custom_call.1} parent=1 // pred_check
      _
    $region19: #{tpu_custom_call.1} parent=1 // pred_check_branch
      %21 = sbr.rel (0) target = $region21
    $region20: #{tpu_custom_call.1} parent=1 // pred_region
      _
    $region21: #{tpu_custom_call.1} parent=1 // pred_fallthru
      _
    %v22 = vld [vmem:[%s1] sm:$0xff]
    %v23 = vld [vmem:[%s1 + $0x8] sm:$0xff]
    %v24 = vld [vmem:[%s1 + $0x10] sm:$0xff]
    %v25 = vld [vmem:[%s1 + $0x18] sm:$0xff]
    %v26 = vld [vmem:[%s1 + $0x20] sm:$0xff]
    %v27 = vld [vmem:[%s1 + $0x28] sm:$0xff]
    %v28 = vld [vmem:[%s1 + $0x30] sm:$0xff]
    %v29 = vld [vmem:[%s1 + $0x38] sm:$0xff]
    %v30 = vld [vmem:[%s1 + $0x40] sm:$0xff]
    %v31 = vld [vmem:[%s1 + $0x48] sm:$0xff]
    %v32 = vld [vmem:[%s1 + $0x50] sm:$0xff]
    %v33 = vld [vmem:[%s1 + $0x58] sm:$0xff]
    %v34 = vld [vmem:[%s1 + $0x60] sm:$0xff]
    %v35 = vld [vmem:[%s1 + $0x68] sm:$0xff]
    %v36 = vld [vmem:[%s1 + $0x70] sm:$0xff]
    %v37 = vld [vmem:[%s1 + $0x78] sm:$0xff]
    %v38 = vld [vmem:[%s0] sm:$0xff]
    %v39 = vld [vmem:[%s0 + $0x8] sm:$0xff]
    %v40 = vld [vmem:[%s0 + $0x10] sm:$0xff]
    %v41 = vld [vmem:[%s0 + $0x18] sm:$0xff]
    %v42 = vld [vmem:[%s0 + $0x20] sm:$0xff]
    %v43 = vld [vmem:[%s0 + $0x28] sm:$0xff]
    %v44 = vld [vmem:[%s0 + $0x30] sm:$0xff]
    %v45 = vld [vmem:[%s0 + $0x38] sm:$0xff]
    %v46 = vld [vmem:[%s0 + $0x40] sm:$0xff]
    %v47 = vld [vmem:[%s0 + $0x48] sm:$0xff]
    %v48 = vld [vmem:[%s0 + $0x50] sm:$0xff]
    %v49 = vld [vmem:[%s0 + $0x58] sm:$0xff]
    %v50 = vld [vmem:[%s0 + $0x60] sm:$0xff]
    %v51 = vld [vmem:[%s0 + $0x68] sm:$0xff]
    %v52 = vld [vmem:[%s0 + $0x70] sm:$0xff]
    %v53 = vld [vmem:[%s0 + $0x78] sm:$0xff]
    %v54 = vld [vmem:[%s2] sm:$0xff]
    %v55 = vld [vmem:[%s2 + $0x8] sm:$0xff]
    %v56 = vld [vmem:[%s2 + $0x10] sm:$0xff]
    %v57 = vld [vmem:[%s2 + $0x18] sm:$0xff]
    %v58 = vld [vmem:[%s2 + $0x20] sm:$0xff]
    %v59 = vld [vmem:[%s2 + $0x28] sm:$0xff]
    %v60 = vld [vmem:[%s2 + $0x30] sm:$0xff]
    %v61 = vld [vmem:[%s2 + $0x38] sm:$0xff]
    %v62 = vld [vmem:[%s2 + $0x40] sm:$0xff]
    %v63 = vld [vmem:[%s2 + $0x48] sm:$0xff]
    %v64 = vld [vmem:[%s2 + $0x50] sm:$0xff]
    %v65 = vld [vmem:[%s2 + $0x58] sm:$0xff]
    %v66 = vld [vmem:[%s2 + $0x60] sm:$0xff]
    %v67 = vld [vmem:[%s2 + $0x68] sm:$0xff]
    %v68 = vld [vmem:[%s2 + $0x70] sm:$0xff]
    %v69 = vld [vmem:[%s2 + $0x78] sm:$0xff]
    %71 = vset.pattern.permute.xlu0 0
    %72 = vperm.xlu0 %71, %v54
    %v73 = vpop.permute.xlu0 %72
    %76 = vset.pattern.permute.xlu0 0
    %77 = vperm.xlu0 %76, %v55
    %v78 = vpop.permute.xlu0 %77
    %81 = vset.pattern.permute.xlu0 0
    %82 = vperm.xlu0 %81, %v56
    %v83 = vpop.permute.xlu0 %82
    %86 = vset.pattern.permute.xlu0 0
    %87 = vperm.xlu0 %86, %v57
    %v88 = vpop.permute.xlu0 %87
    %91 = vset.pattern.permute.xlu0 0
    %92 = vperm.xlu0 %91, %v58
    %v93 = vpop.permute.xlu0 %92
    %96 = vset.pattern.permute.xlu0 0
    %97 = vperm.xlu0 %96, %v59
    %v98 = vpop.permute.xlu0 %97
    %101 = vset.pattern.permute.xlu0 0
    %102 = vperm.xlu0 %101, %v60
    %v103 = vpop.permute.xlu0 %102
    %106 = vset.pattern.permute.xlu0 0
    %107 = vperm.xlu0 %106, %v61
    %v108 = vpop.permute.xlu0 %107
    %111 = vset.pattern.permute.xlu0 0
    %112 = vperm.xlu0 %111, %v62
    %v113 = vpop.permute.xlu0 %112
    %116 = vset.pattern.permute.xlu0 0
    %117 = vperm.xlu0 %116, %v63
    %v118 = vpop.permute.xlu0 %117
    %121 = vset.pattern.permute.xlu0 0
    %122 = vperm.xlu0 %121, %v64
    %v123 = vpop.permute.xlu0 %122
    %126 = vset.pattern.permute.xlu0 0
    %127 = vperm.xlu0 %126, %v65
    %v128 = vpop.permute.xlu0 %127
    %131 = vset.pattern.permute.xlu0 0
    %132 = vperm.xlu0 %131, %v66
    %v133 = vpop.permute.xlu0 %132
    %136 = vset.pattern.permute.xlu0 0
    %137 = vperm.xlu0 %136, %v67
    %v138 = vpop.permute.xlu0 %137
    %141 = vset.pattern.permute.xlu0 0
    %142 = vperm.xlu0 %141, %v68
    %v143 = vpop.permute.xlu0 %142
    %146 = vset.pattern.permute.xlu0 0
    %147 = vperm.xlu0 %146, %v69
    %v148 = vpop.permute.xlu0 %147
    %vm150 = vcmask 261120
    %v152 = vsel %vm150, %v22, 0
    %v155 = vsel %vm150, %v23, 0
    %v158 = vsel %vm150, %v24, 0
    %v161 = vsel %vm150, %v25, 0
    %v164 = vsel %vm150, %v26, 0
    %v167 = vsel %vm150, %v27, 0
    %v170 = vsel %vm150, %v28, 0
    %v173 = vsel %vm150, %v29, 0
    %v176 = vsel %vm150, %v30, 0
    %v179 = vsel %vm150, %v31, 0
    %v182 = vsel %vm150, %v32, 0
    %v185 = vsel %vm150, %v33, 0
    %v188 = vsel %vm150, %v34, 0
    %v191 = vsel %vm150, %v35, 0
    %v194 = vsel %vm150, %v36, 0
    %v197 = vsel %vm150, %v37, 0
    %v200 = vsel %vm150, %v38, 0
    %v203 = vsel %vm150, %v39, 0
    %v206 = vsel %vm150, %v40, 0
    %v209 = vsel %vm150, %v41, 0
    %v212 = vsel %vm150, %v42, 0
    %v215 = vsel %vm150, %v43, 0
    %v218 = vsel %vm150, %v44, 0
    %v221 = vsel %vm150, %v45, 0
    %v224 = vsel %vm150, %v46, 0
    %v227 = vsel %vm150, %v47, 0
    %v230 = vsel %vm150, %v48, 0
    %v233 = vsel %vm150, %v49, 0
    %v236 = vsel %vm150, %v50, 0
    %v239 = vsel %vm150, %v51, 0
    %v242 = vsel %vm150, %v52, 0
    %v245 = vsel %vm150, %v53, 0
    %247 = vmatprep.subr.mxu0 0.0
    %248 = vmatpush1.xpose.msra.mxu0 %v200
    %249 = vmatprep.subr.mxu0 0.0
    %250 = vmatpush1.xpose.msra.mxu0 %v203
    %251 = vmatprep.subr.mxu0 0.0
    %252 = vmatpush1.xpose.msra.mxu0 %v206
    %253 = vmatprep.subr.mxu0 0.0
    %254 = vmatpush1.xpose.msra.mxu0 %v209
    %255 = vmatprep.subr.mxu0 0.0
    %256 = vmatpush1.xpose.msra.mxu0 %v212
    %257 = vmatprep.subr.mxu0 0.0
    %258 = vmatpush1.xpose.msra.mxu0 %v215
    %259 = vmatprep.subr.mxu0 0.0
    %260 = vmatpush1.xpose.msra.mxu0 %v218
    %261 = vmatprep.subr.mxu0 0.0
    %262 = vmatpush1.xpose.msra.mxu0 %v221
    %263 = vmatprep.subr.mxu0 0.0
    %264 = vmatpush1.xpose.msra.mxu0 %v224
    %265 = vmatprep.subr.mxu0 0.0
    %266 = vmatpush1.xpose.msra.mxu0 %v227
    %267 = vmatprep.subr.mxu0 0.0
    %268 = vmatpush1.xpose.msra.mxu0 %v230
    %269 = vmatprep.subr.mxu0 0.0
    %270 = vmatpush1.xpose.msra.mxu0 %v233
    %271 = vmatprep.subr.mxu0 0.0
    %272 = vmatpush1.xpose.msra.mxu0 %v236
    %273 = vmatprep.subr.mxu0 0.0
    %274 = vmatpush1.xpose.msra.mxu0 %v239
    %275 = vmatprep.subr.mxu0 0.0
    %276 = vmatpush1.xpose.msra.mxu0 %v242
    %277 = vmatprep.subr.mxu0 0.0
    %278 = vmatpush1.xpose.msra.mxu0 %v245
    %279 = vmatprep.subr.mxu0 0.0
    %280 = vmatpush1.xpose.msra.mxu0 0.0
    %281 = vmatprep.subr.mxu0 0.0
    %282 = vmatpush1.xpose.msra.mxu0 0.0
    %283 = vmatprep.subr.mxu0 0.0
    %284 = vmatpush1.xpose.msra.mxu0 0.0
    %285 = vmatprep.subr.mxu0 0.0
    %286 = vmatpush1.xpose.msra.mxu0 0.0
    %287 = vmatprep.subr.mxu0 0.0
    %288 = vmatpush1.xpose.msra.mxu0 0.0
    %289 = vmatprep.subr.mxu0 0.0
    %290 = vmatpush1.xpose.msra.mxu0 0.0
    %291 = vmatprep.subr.mxu0 0.0
    %292 = vmatpush1.xpose.msra.mxu0 0.0
    %293 = vmatprep.subr.mxu0 0.0
    %294 = vmatpush1.xpose.msra.mxu0 0.0
    %295 = vmatprep.subr.mxu0 0.0
    %296 = vmatpush1.xpose.msra.mxu0 0.0
    %297 = vmatprep.subr.mxu0 0.0
    %298 = vmatpush1.xpose.msra.mxu0 0.0
    %299 = vmatprep.subr.mxu0 0.0
    %300 = vmatpush1.xpose.msra.mxu0 0.0
    %301 = vmatprep.subr.mxu0 0.0
    %302 = vmatpush1.xpose.msra.mxu0 0.0
    %303 = vmatprep.subr.mxu0 0.0
    %304 = vmatpush1.xpose.msra.mxu0 0.0
    %305 = vmatprep.subr.mxu0 0.0
    %306 = vmatpush1.xpose.msra.mxu0 0.0
    %307 = vmatprep.subr.mxu0 0.0
    %308 = vmatpush1.xpose.msra.mxu0 0.0
    %309 = vmatprep.subr.mxu0 0.0
    %310 = vmatpush1.xpose.msra.mxu0 0.0
    %311 = vmatprep.mubr.f32.mxu0 0.0
    %312 = vmatmul.mubr.f32.gmra.mrb[0].mxu0 %v152
    %v313 = vpop.f32.mrb[0].mxu0
    %v314 = vadd.f32 %v73, %v313
    %v315 = vpop.f32.mrb[0].mxu0
    %316 = vmatprep.mubr.f32.mxu0 0.0
    %317 = vmatmul.mubr.f32.gmra.mrb[0].mxu0 %v155
    %v318 = vpop.f32.mrb[0].mxu0
    %v319 = vadd.f32 %v78, %v318
    %v320 = vpop.f32.mrb[0].mxu0
    %321 = vmatprep.mubr.f32.mxu0 0.0
    %322 = vmatmul.mubr.f32.gmra.mrb[0].mxu0 %v158
    %v323 = vpop.f32.mrb[0].mxu0
    %v324 = vadd.f32 %v83, %v323
    %v325 = vpop.f32.mrb[0].mxu0
    %326 = vmatprep.mubr.f32.mxu0 0.0
    %327 = vmatmul.mubr.f32.gmra.mrb[0].mxu0 %v161
    %v328 = vpop.f32.mrb[0].mxu0
    %v329 = vadd.f32 %v88, %v328
    %v330 = vpop.f32.mrb[0].mxu0
    %331 = vmatprep.mubr.f32.mxu0 0.0
    %332 = vmatmul.mubr.f32.gmra.mrb[0].mxu0 %v164
    %v333 = vpop.f32.mrb[0].mxu0
    %v334 = vadd.f32 %v93, %v333
    %v335 = vpop.f32.mrb[0].mxu0
    %336 = vmatprep.mubr.f32.mxu0 0.0
    %337 = vmatmul.mubr.f32.gmra.mrb[0].mxu0 %v167
    %v338 = vpop.f32.mrb[0].mxu0
    %v339 = vadd.f32 %v98, %v338
    %v340 = vpop.f32.mrb[0].mxu0
    %341 = vmatprep.mubr.f32.mxu0 0.0
    %342 = vmatmul.mubr.f32.gmra.mrb[0].mxu0 %v170
    %v343 = vpop.f32.mrb[0].mxu0
    %v344 = vadd.f32 %v103, %v343
    %v345 = vpop.f32.mrb[0].mxu0
    %346 = vmatprep.mubr.f32.mxu0 0.0
    %347 = vmatmul.mubr.f32.gmra.mrb[0].mxu0 %v173
    %v348 = vpop.f32.mrb[0].mxu0
    %v349 = vadd.f32 %v108, %v348
    %v350 = vpop.f32.mrb[0].mxu0
    %351 = vmatprep.mubr.f32.mxu0 0.0
    %352 = vmatmul.mubr.f32.gmra.mrb[0].mxu0 %v176
    %v353 = vpop.f32.mrb[0].mxu0
    %v354 = vadd.f32 %v113, %v353
    %v355 = vpop.f32.mrb[0].mxu0
    %356 = vmatprep.mubr.f32.mxu0 0.0
    %357 = vmatmul.mubr.f32.gmra.mrb[0].mxu0 %v179
    %v358 = vpop.f32.mrb[0].mxu0
    %v359 = vadd.f32 %v118, %v358
    %v360 = vpop.f32.mrb[0].mxu0
    %361 = vmatprep.mubr.f32.mxu0 0.0
    %362 = vmatmul.mubr.f32.gmra.mrb[0].mxu0 %v182
    %v363 = vpop.f32.mrb[0].mxu0
    %v364 = vadd.f32 %v123, %v363
    %v365 = vpop.f32.mrb[0].mxu0
    %366 = vmatprep.mubr.f32.mxu0 0.0
    %367 = vmatmul.mubr.f32.gmra.mrb[0].mxu0 %v185
    %v368 = vpop.f32.mrb[0].mxu0
    %v369 = vadd.f32 %v128, %v368
    %v370 = vpop.f32.mrb[0].mxu0
    %371 = vmatprep.mubr.f32.mxu0 0.0
    %372 = vmatmul.mubr.f32.gmra.mrb[0].mxu0 %v188
    %v373 = vpop.f32.mrb[0].mxu0
    %v374 = vadd.f32 %v133, %v373
    %v375 = vpop.f32.mrb[0].mxu0
    %376 = vmatprep.mubr.f32.mxu0 0.0
    %377 = vmatmul.mubr.f32.gmra.mrb[0].mxu0 %v191
    %v378 = vpop.f32.mrb[0].mxu0
    %v379 = vadd.f32 %v138, %v378
    %v380 = vpop.f32.mrb[0].mxu0
    %381 = vmatprep.mubr.f32.mxu0 0.0
    %382 = vmatmul.mubr.f32.gmra.mrb[0].mxu0 %v194
    %v383 = vpop.f32.mrb[0].mxu0
    %v384 = vadd.f32 %v143, %v383
    %v385 = vpop.f32.mrb[0].mxu0
    %386 = vmatprep.mubr.f32.mxu0 0.0
    %387 = vmatmul.mubr.f32.gmra.mrb[0].mxu0 %v197
    %v388 = vpop.f32.mrb[0].mxu0
    %v389 = vadd.f32 %v148, %v388
    %v390 = vpop.f32.mrb[0].mxu0
    %391 = vdwg.mxu0
    %v392 = vmax.f32 %v314, 0.0
    %v393 = vmax.f32 %v319, 0.0
    %v394 = vmax.f32 %v324, 0.0
    %v395 = vmax.f32 %v329, 0.0
    %v396 = vmax.f32 %v334, 0.0
    %v397 = vmax.f32 %v339, 0.0
    %v398 = vmax.f32 %v344, 0.0
    %v399 = vmax.f32 %v349, 0.0
    %v400 = vmax.f32 %v354, 0.0
    %v401 = vmax.f32 %v359, 0.0
    %v402 = vmax.f32 %v364, 0.0
    %v403 = vmax.f32 %v369, 0.0
    %v404 = vmax.f32 %v374, 0.0
    %v405 = vmax.f32 %v379, 0.0
    %v406 = vmax.f32 %v384, 0.0
    %v407 = vmax.f32 %v389, 0.0
    %v408 = vld [vmem:[%s3] sm:$0x1]
    %s409 = sld [smem:[#allocation2]]
    %v410 = vstv %s409
    %411 = vmatprep.subr.mxu0 0.0
    %412 = vmatpush1.msra.mxu0 %v392
    %413 = vmatprep.subr.mxu0 0.0
    %414 = vmatpush1.msra.mxu0 %v393
    %415 = vmatprep.subr.mxu0 0.0
    %416 = vmatpush1.msra.mxu0 %v394
    %417 = vmatprep.subr.mxu0 0.0
    %418 = vmatpush1.msra.mxu0 %v395
    %419 = vmatprep.subr.mxu0 0.0
    %420 = vmatpush1.msra.mxu0 %v396
    %421 = vmatprep.subr.mxu0 0.0
    %422 = vmatpush1.msra.mxu0 %v397
    %423 = vmatprep.subr.mxu0 0.0
    %424 = vmatpush1.msra.mxu0 %v398
    %425 = vmatprep.subr.mxu0 0.0
    %426 = vmatpush1.msra.mxu0 %v399
    %427 = vmatprep.subr.mxu0 0.0
    %428 = vmatpush1.msra.mxu0 %v400
    %429 = vmatprep.subr.mxu0 0.0
    %430 = vmatpush1.msra.mxu0 %v401
    %431 = vmatprep.subr.mxu0 0.0
    %432 = vmatpush1.msra.mxu0 %v402
    %433 = vmatprep.subr.mxu0 0.0
    %434 = vmatpush1.msra.mxu0 %v403
    %435 = vmatprep.subr.mxu0 0.0
    %436 = vmatpush1.msra.mxu0 %v404
    %437 = vmatprep.subr.mxu0 0.0
    %438 = vmatpush1.msra.mxu0 %v405
    %439 = vmatprep.subr.mxu0 0.0
    %440 = vmatpush1.msra.mxu0 %v406
    %441 = vmatprep.subr.mxu0 0.0
    %442 = vmatpush1.msra.mxu0 %v407
    %443 = vmatprep.subr.mxu0 0.0
    %444 = vmatpush1.msra.mxu0 0.0
    %445 = vmatprep.subr.mxu0 0.0
    %446 = vmatpush1.msra.mxu0 0.0
    %447 = vmatprep.subr.mxu0 0.0
    %448 = vmatpush1.msra.mxu0 0.0
    %449 = vmatprep.subr.mxu0 0.0
    %450 = vmatpush1.msra.mxu0 0.0
    %451 = vmatprep.subr.mxu0 0.0
    %452 = vmatpush1.msra.mxu0 0.0
    %453 = vmatprep.subr.mxu0 0.0
    %454 = vmatpush1.msra.mxu0 0.0
    %455 = vmatprep.subr.mxu0 0.0
    %456 = vmatpush1.msra.mxu0 0.0
    %457 = vmatprep.subr.mxu0 0.0
    %458 = vmatpush1.msra.mxu0 0.0
    %459 = vmatprep.subr.mxu0 0.0
    %460 = vmatpush1.msra.mxu0 0.0
    %461 = vmatprep.subr.mxu0 0.0
    %462 = vmatpush1.msra.mxu0 0.0
    %463 = vmatprep.subr.mxu0 0.0
    %464 = vmatpush1.msra.mxu0 0.0
    %465 = vmatprep.subr.mxu0 0.0
    %466 = vmatpush1.msra.mxu0 0.0
    %467 = vmatprep.subr.mxu0 0.0
    %468 = vmatpush1.msra.mxu0 0.0
    %469 = vmatprep.subr.mxu0 0.0
    %470 = vmatpush1.msra.mxu0 0.0
    %471 = vmatprep.subr.mxu0 0.0
    %472 = vmatpush1.msra.mxu0 0.0
    %473 = vmatprep.subr.mxu0 0.0
    %474 = vmatpush1.msra.mxu0 0.0
    %475 = vmatprep.mubr.f32.mxu0 0.0
    %476 = vmatmul.mubr.f32.gmra.mrb[0].mxu0 %v408
    %v477 = vpop.f32.mrb[0].mxu0
    %v478 = vadd.f32 %v410, %v477
    %v479 = vpop.f32.mrb[0].mxu0
    %480 = vdwg.mxu0
    %481 = vst [vmem:[#allocation3] sm:$0x1] %v478
    // Predicated region
    $region22: #{tpu_custom_call.1} parent=1 // pred_check
      _
    $region23: #{tpu_custom_call.1} parent=1 // pred_check_branch
      %483 = sbr.rel (0) target = $region25
    $region24: #{tpu_custom_call.1} parent=1 // pred_region
      %s485 = ssub.s32 16, 16
      %486 = vsyncadd [#allocation4], %s485
      %s488 = sshll.u32 [#allocation3], 4
      %s489 = int_to_ptr.vmem [resolvable:$true] %s488
      %491 = dma.vmem_to_hbm [thread:$0]  %s489, 16, %s5, [#allocation4]
    $region25: #{tpu_custom_call.1} parent=1 // pred_fallthru
      _
    // Predicated region
    $region26: #{tpu_custom_call.1} parent=1 // pred_check
      _
    $region27: #{tpu_custom_call.1} parent=1 // pred_check_branch
      %493 = sbr.rel (0) target = $region29
    $region28: #{tpu_custom_call.1} parent=1 // pred_region
      %494 = dma.done [#allocation4], 16
    $region29: #{tpu_custom_call.1} parent=1 // pred_fallthru
      _
    %495 = vsyncpa [#allocation4], 1

</llo_original>
